<compile_context>
chip_gen: v7x
topology: tpu7x:2x2x1
jax: 0.10.0
libtpu: 0.0.40
codegen_flags: <defaults>
</compile_context>

<pallas_src>
import jax
import jax.numpy as jnp
from jax.experimental import pallas as pl
from jax.experimental.pallas import tpu as pltpu

H1 = 64
H2 = 32
OUT = 1


def car_price_mlp_kernel(x_ref, w1_ref, b1_ref, w2_ref, b2_ref, w3p_ref, b3_ref,
                         o_ref):
    """One batch tile, batch-in-lane orientation: all intermediates (H, TB)."""
    x = x_ref[...]                                            # (TB, D) f32

    # fc1 + ReLU: (64, D) . (TB, D)^T -> (64, TB)   (contract both last dims)
    h1 = jax.lax.dot_general(w1_ref[...], x,
                             dimension_numbers=(((1,), (1,)), ((), ())),
                             preferred_element_type=jnp.float32)
    h1 = jnp.maximum(h1 + b1_ref[...], 0.0)                   # (64, TB)

    # fc2 + ReLU: (32, 64) . (64, TB) -> (32, TB)
    h2 = jnp.dot(w2_ref[...], h1, preferred_element_type=jnp.float32)
    h2 = jnp.maximum(h2 + b2_ref[...], 0.0)                   # (32, TB)

    # fc3: w3 zero-padded from 1 to 8 sublane rows so the MXU LHS is well
    # shaped; only row 0 is the real output.  (8, 32) . (32, TB) -> (8, TB)
    y = jnp.dot(w3p_ref[...], h2, preferred_element_type=jnp.float32)
    o_ref[...] = (y[0:1, :] + b3_ref[...]).astype(o_ref.dtype)  # (1, TB) lane-dense


def _round_up(n, m):
    return (n + m - 1) // m * m


def _pick_tb(batch, tb_max):
    """Batch tile size: whole batch if small, else >=2 aligned tiles (v7x)."""
    if batch <= 256:
        return batch                      # single tile == full array, any alignment
    half = pl.cdiv(batch, 2)
    return min(_round_up(half, 256), tb_max)


def car_price_ann(x, params, *, tb_max=2048):
    """Forward pass. x: (B, D) float32 -> (B, 1) float32."""
    w1, b1, w2, b2, w3, b3 = params       # PyTorch layout: (out, in) / (out, 1)
    B, D = x.shape
    assert tb_max % 256 == 0

    tb = _pick_tb(B, tb_max)
    grid = pl.cdiv(B, tb)                 # boundary block handled by Pallas (no pad)

    # fc3 weight row zero-padded to 8 sublane rows for a well-shaped MXU LHS.
    w3p = jnp.pad(w3, ((0, 8 - w3.shape[0]), (0, 0)))          # (8, 32)

    # Weights/biases: constant index_map -> fetched once, VMEM-resident.
    resident = lambda a: pl.BlockSpec(a.shape, lambda i: (0, 0))

    flops = 2 * B * (D * H1 + H1 * H2 + H2 * OUT)
    bytes_accessed = 4 * (B * D + B * OUT
                          + D * H1 + H1 + H1 * H2 + H2 + H2 * OUT + OUT)

    out_row = pl.pallas_call(
        car_price_mlp_kernel,
        out_shape=jax.ShapeDtypeStruct((1, B), jnp.float32),
        grid_spec=pltpu.PrefetchScalarGridSpec(
            num_scalar_prefetch=0,
            grid=(grid,),
            in_specs=[
                pl.BlockSpec((tb, D), lambda i: (i, 0)),       # x: streamed per tile
                resident(w1), resident(b1),
                resident(w2), resident(b2),
                resident(w3p), resident(b3),
            ],
            out_specs=pl.BlockSpec((1, tb), lambda i: (0, i)),  # lane-dense output
        ),
        compiler_params=pltpu.CompilerParams(
            dimension_semantics=("parallel",),   # shard batch tiles across TCs (v7x)
        ),
        cost_estimate=pl.CostEstimate(flops=flops, transcendentals=0,
                                      bytes_accessed=bytes_accessed),
    )(x, w1, b1, w2, b2, w3p, b3)

    # (1, B) row -> (B, 1) column: free row-major reshape.
    return out_row.reshape(B, 1)


def init_params(key, input_dim):
    """nn.Linear-style init U(-1/sqrt(fan_in), 1/sqrt(fan_in)), PyTorch layout:
    weights (out, in), biases stored as (out, 1) columns for the lane-broadcast."""
    def linear(k, fan_in, fan_out):
        kw, kb = jax.random.split(k)
        bound = 1.0 / jnp.sqrt(jnp.float32(fan_in))
        w = jax.random.uniform(kw, (fan_out, fan_in), jnp.float32, -bound, bound)
        b = jax.random.uniform(kb, (fan_out, 1), jnp.float32, -bound, bound)
        return w, b

    k1, k2, k3 = jax.random.split(key, 3)
    w1, b1 = linear(k1, input_dim, H1)
    w2, b2 = linear(k2, H1, H2)
    w3, b3 = linear(k3, H2, OUT)
    return (w1, b1, w2, b2, w3, b3)


def reference_forward(x, params):
    """Pure-JAX reference (Precision.HIGHEST matmuls) for the self-check."""
    w1, b1, w2, b2, w3, b3 = params
    hp = jax.lax.Precision.HIGHEST
    h1 = jnp.maximum(jnp.dot(x, w1.T, precision=hp) + b1.T, 0.0)
    h2 = jnp.maximum(jnp.dot(h1, w2.T, precision=hp) + b2.T, 0.0)
    return jnp.dot(h2, w3.T, precision=hp) + b3.T


if __name__ == "__main__":
    key = jax.random.PRNGKey(0)
    k_params, k_x1, k_x2 = jax.random.split(key, 3)

    input_dim = 16  # number of tabular car features
    params = init_params(k_params, input_dim)

    # Case 1: small batch -> single exact tile, no grid iteration.
    x_small = jax.random.normal(k_x1, (8, input_dim), jnp.float32)
    out_small = jax.block_until_ready(car_price_ann(x_small, params))
    ref_small = reference_forward(x_small, params)
    assert out_small.shape == (8, 1)
    assert jnp.allclose(out_small, ref_small, atol=2e-3, rtol=2e-3), \
        "small-batch mismatch vs reference"

    # Case 2: exercises the batch grid (2 tiles of 256 rows, last one partial,
    # handled by Pallas boundary-block padding/masked writeback — no jnp.pad).
    x_big = jax.random.normal(k_x2, (300, input_dim), jnp.float32)
    out_big = jax.block_until_ready(car_price_ann(x_big, params))
    ref_big = reference_forward(x_big, params)
    assert out_big.shape == (300, 1)
    assert jnp.allclose(out_big, ref_big, atol=2e-3, rtol=2e-3), \
        "gridded-batch mismatch vs reference"

    print("KERNEL_OK")
</pallas_src>

<mosaic_0001>
module attributes {stable_mosaic.version = 11 : i64} {
  func.func @car_price_mlp_kernel(%arg0: i32, %arg1: memref<8x16xf32, #tpu.memory_space<vmem>>, %arg2: memref<64x16xf32, #tpu.memory_space<vmem>>, %arg3: memref<64x1xf32, #tpu.memory_space<vmem>>, %arg4: memref<32x64xf32, #tpu.memory_space<vmem>>, %arg5: memref<32x1xf32, #tpu.memory_space<vmem>>, %arg6: memref<8x32xf32, #tpu.memory_space<vmem>>, %arg7: memref<1x1xf32, #tpu.memory_space<vmem>>, %arg8: memref<1x8xf32, #tpu.memory_space<vmem>>) attributes {dimension_semantics = [#tpu.dimension_semantics<parallel>], iteration_bounds = array<i64: 1>, scalar_prefetch = 0 : i64, scratch_operands = 0 : i64, tpu.core_type = #tpu.core_type<tc>, window_params = [{transform_indices = @transform_0, window_bounds = array<i64: 8, 16>}, {pipeline_mode = #tpu.pipeline_mode<synchronous>, transform_indices = @transform_1, window_bounds = array<i64: 64, 16>}, {pipeline_mode = #tpu.pipeline_mode<synchronous>, transform_indices = @transform_2, window_bounds = array<i64: 64, 1>}, {pipeline_mode = #tpu.pipeline_mode<synchronous>, transform_indices = @transform_3, window_bounds = array<i64: 32, 64>}, {pipeline_mode = #tpu.pipeline_mode<synchronous>, transform_indices = @transform_4, window_bounds = array<i64: 32, 1>}, {pipeline_mode = #tpu.pipeline_mode<synchronous>, transform_indices = @transform_5, window_bounds = array<i64: 8, 32>}, {pipeline_mode = #tpu.pipeline_mode<synchronous>, transform_indices = @transform_6, window_bounds = array<i64: 1, 1>}, {transform_indices = @transform_7, window_bounds = array<i64: 1, 8>}]} {
    %c0 = arith.constant 0 : index
    %c0_0 = arith.constant 0 : index
    %0 = vector.load %arg1[%c0, %c0_0] : memref<8x16xf32, #tpu.memory_space<vmem>>, vector<8x16xf32>
    %c0_1 = arith.constant 0 : index
    %c0_2 = arith.constant 0 : index
    %1 = vector.load %arg2[%c0_1, %c0_2] : memref<64x16xf32, #tpu.memory_space<vmem>>, vector<64x16xf32>
    %cst = arith.constant dense<0.000000e+00> : vector<64x8xf32>
    %2 = tpu.matmul %1, %0, %cst {dimension_numbers = #tpu.dot_dimension_numbers<[1], [1], [0], [0], [0, 0, 1, 0], [], []>} : vector<64x16xf32>, vector<8x16xf32>, vector<64x8xf32> -> vector<64x8xf32>
    %c0_3 = arith.constant 0 : index
    %c0_4 = arith.constant 0 : index
    %3 = vector.load %arg3[%c0_3, %c0_4] : memref<64x1xf32, #tpu.memory_space<vmem>>, vector<64x1xf32>
    %4 = vector.broadcast %3 : vector<64x1xf32> to vector<64x8xf32>
    %5 = arith.addf %2, %4 : vector<64x8xf32>
    %cst_5 = arith.constant 0.000000e+00 : f32
    %6 = vector.broadcast %cst_5 : f32 to vector<64x8xf32>
    %7 = arith.maximumf %5, %6 : vector<64x8xf32>
    %c0_6 = arith.constant 0 : index
    %c0_7 = arith.constant 0 : index
    %8 = vector.load %arg4[%c0_6, %c0_7] : memref<32x64xf32, #tpu.memory_space<vmem>>, vector<32x64xf32>
    %cst_8 = arith.constant dense<0.000000e+00> : vector<32x8xf32>
    %9 = tpu.matmul %8, %7, %cst_8 {dimension_numbers = #tpu.dot_dimension_numbers<[1], [0], [0], [1], [0, 0, 1, 1], [], []>} : vector<32x64xf32>, vector<64x8xf32>, vector<32x8xf32> -> vector<32x8xf32>
    %c0_9 = arith.constant 0 : index
    %c0_10 = arith.constant 0 : index
    %10 = vector.load %arg5[%c0_9, %c0_10] : memref<32x1xf32, #tpu.memory_space<vmem>>, vector<32x1xf32>
    %11 = vector.broadcast %10 : vector<32x1xf32> to vector<32x8xf32>
    %12 = arith.addf %9, %11 : vector<32x8xf32>
    %cst_11 = arith.constant 0.000000e+00 : f32
    %13 = vector.broadcast %cst_11 : f32 to vector<32x8xf32>
    %14 = arith.maximumf %12, %13 : vector<32x8xf32>
    %c0_12 = arith.constant 0 : index
    %c0_13 = arith.constant 0 : index
    %15 = vector.load %arg6[%c0_12, %c0_13] : memref<8x32xf32, #tpu.memory_space<vmem>>, vector<8x32xf32>
    %cst_14 = arith.constant dense<0.000000e+00> : vector<8x8xf32>
    %16 = tpu.matmul %15, %14, %cst_14 {dimension_numbers = #tpu.dot_dimension_numbers<[1], [0], [0], [1], [0, 0, 1, 1], [], []>} : vector<8x32xf32>, vector<32x8xf32>, vector<8x8xf32> -> vector<8x8xf32>
    %17 = vector.extract_strided_slice %16 {offsets = [0, 0], sizes = [1, 8], strides = [1, 1]} : vector<8x8xf32> to vector<1x8xf32>
    %c0_15 = arith.constant 0 : index
    %c0_16 = arith.constant 0 : index
    %18 = vector.load %arg7[%c0_15, %c0_16] : memref<1x1xf32, #tpu.memory_space<vmem>>, vector<1x1xf32>
    %19 = vector.broadcast %18 : vector<1x1xf32> to vector<1x8xf32>
    %20 = arith.addf %17, %19 : vector<1x8xf32>
    %c0_17 = arith.constant 0 : index
    %c0_18 = arith.constant 0 : index
    %21 = vector.load %arg8[%c0_17, %c0_18] : memref<1x8xf32, #tpu.memory_space<vmem>>, vector<1x8xf32>
    tpu.vector_store %arg8[%c0_17, %c0_18], %20 {strides = array<i32>} : memref<1x8xf32, #tpu.memory_space<vmem>>, vector<1x8xf32>,
    return
  }
  func.func @transform_0(%arg0: i32) -> (i32, i32) {
    %c0_i32 = arith.constant 0 : i32
    %c0_i32_0 = arith.constant 0 : i32
    return %arg0, %c0_i32 : i32, i32
  }
  func.func @transform_1(%arg0: i32) -> (i32, i32) {
    %c0_i32 = arith.constant 0 : i32
    %c0_i32_0 = arith.constant 0 : i32
    %c0_i32_1 = arith.constant 0 : i32
    return %c0_i32, %c0_i32_0 : i32, i32
  }
  func.func @transform_2(%arg0: i32) -> (i32, i32) {
    %c0_i32 = arith.constant 0 : i32
    %c0_i32_0 = arith.constant 0 : i32
    %c0_i32_1 = arith.constant 0 : i32
    return %c0_i32, %c0_i32_0 : i32, i32
  }
  func.func @transform_3(%arg0: i32) -> (i32, i32) {
    %c0_i32 = arith.constant 0 : i32
    %c0_i32_0 = arith.constant 0 : i32
    %c0_i32_1 = arith.constant 0 : i32
    return %c0_i32, %c0_i32_0 : i32, i32
  }
  func.func @transform_4(%arg0: i32) -> (i32, i32) {
    %c0_i32 = arith.constant 0 : i32
    %c0_i32_0 = arith.constant 0 : i32
    %c0_i32_1 = arith.constant 0 : i32
    return %c0_i32, %c0_i32_0 : i32, i32
  }
  func.func @transform_5(%arg0: i32) -> (i32, i32) {
    %c0_i32 = arith.constant 0 : i32
    %c0_i32_0 = arith.constant 0 : i32
    %c0_i32_1 = arith.constant 0 : i32
    return %c0_i32, %c0_i32_0 : i32, i32
  }
  func.func @transform_6(%arg0: i32) -> (i32, i32) {
    %c0_i32 = arith.constant 0 : i32
    %c0_i32_0 = arith.constant 0 : i32
    %c0_i32_1 = arith.constant 0 : i32
    return %c0_i32, %c0_i32_0 : i32, i32
  }
  func.func @transform_7(%arg0: i32) -> (i32, i32) {
    %c0_i32 = arith.constant 0 : i32
    %c0_i32_0 = arith.constant 0 : i32
    return %c0_i32, %arg0 : i32, i32
  }
}

</mosaic_0001>

<llo_original>
// kernel: tpu_custom_call.1
$region0: #{tpu_custom_call.1}
  #allocation0 [shape = 'u32[]', space=smem, size = 0x4, offset = 0x4, fixed_abs, tag = 'smem constant byte address 0x4 - core index']
  #allocation1 [shape = 'u32[144,128]{1,0:T(1,128)}', space=vmem, size = 0x12000, scoped, tag = 'internal scratch']
  #allocation2 [shape = 'f32[1,1]{1,0:T(1,128)S(1)}', space=vmem, size = 0x200, scoped, tag = 'scoped memory for tpu_custom_call.1']
  %s0 = inlined_call_operand.vmem [shape: f32[8,16], index: 0, kind: input, shape index: {}]
  %s1 = inlined_call_operand.vmem [shape: f32[64,16], index: 1, kind: input, shape index: {}]
  %s2 = inlined_call_operand.vmem [shape: f32[64,1], index: 2, kind: input, shape index: {}]
  %s3 = inlined_call_operand.vmem [shape: f32[32,64], index: 3, kind: input, shape index: {}]
  %s4 = inlined_call_operand.vmem [shape: f32[32,1], index: 4, kind: input, shape index: {}]
  %s5 = inlined_call_operand.vmem [shape: f32[8,32], index: 5, kind: input, shape index: {}]
  %s6 = inlined_call_operand.<no memory space> [shape: f32[1,1], index: 6, kind: input, shape index: {}]
  %s7 = inlined_call_operand.hbm [shape: f32[1,8], index: 7, kind: output, shape index: {}]
  %s8 = sld [smem:[#allocation0]]
  $region38: #{tpu_custom_call.1} parent=0
    _
  %s10 = ssub.s32 1, %s8
  %s11 = scalar_select 0, %s10, %s8
  %v12 = vstv %s6
  %13 = vst [vmem:[#allocation2] sm:$0x1] %v12
  $region1: #{tpu_custom_call.1} parent=0
    #allocation3 [shape = 'u8[512]{0}', space=vmem, size = 0x400, scoped, tag = 'output window, operand 0, single buffered']
    #allocation4 [shape = 's32[1]{0}', space=sflag, size = 0x4, scoped, tag = 'scoped memory for tpu_custom_call.1']
    %14 = vsyncpa [#allocation4], 0
    // Predicated region
    $region2: #{tpu_custom_call.1} parent=1 // pred_check
      _
    $region3: #{tpu_custom_call.1} parent=1 // pred_check_branch
      %16 = sbr.rel (0) target = $region5
    $region4: #{tpu_custom_call.1} parent=1 // pred_region
      _
    $region5: #{tpu_custom_call.1} parent=1 // pred_fallthru
      _
    // Predicated region
    $region6: #{tpu_custom_call.1} parent=1 // pred_check
      _
    $region7: #{tpu_custom_call.1} parent=1 // pred_check_branch
      %18 = sbr.rel (0) target = $region9
    $region8: #{tpu_custom_call.1} parent=1 // pred_region
      _
    $region9: #{tpu_custom_call.1} parent=1 // pred_fallthru
      _
    // Predicated region
    $region10: #{tpu_custom_call.1} parent=1 // pred_check
      _
    $region11: #{tpu_custom_call.1} parent=1 // pred_check_branch
      %20 = sbr.rel (0) target = $region13
    $region12: #{tpu_custom_call.1} parent=1 // pred_region
      _
    $region13: #{tpu_custom_call.1} parent=1 // pred_fallthru
      _
    // Predicated region
    $region14: #{tpu_custom_call.1} parent=1 // pred_check
      _
    $region15: #{tpu_custom_call.1} parent=1 // pred_check_branch
      %22 = sbr.rel (0) target = $region17
    $region16: #{tpu_custom_call.1} parent=1 // pred_region
      _
    $region17: #{tpu_custom_call.1} parent=1 // pred_fallthru
      _
    // Predicated region
    $region18: #{tpu_custom_call.1} parent=1 // pred_check
      _
    $region19: #{tpu_custom_call.1} parent=1 // pred_check_branch
      %24 = sbr.rel (0) target = $region21
    $region20: #{tpu_custom_call.1} parent=1 // pred_region
      _
    $region21: #{tpu_custom_call.1} parent=1 // pred_fallthru
      _
    // Predicated region
    $region22: #{tpu_custom_call.1} parent=1 // pred_check
      _
    $region23: #{tpu_custom_call.1} parent=1 // pred_check_branch
      %26 = sbr.rel (0) target = $region25
    $region24: #{tpu_custom_call.1} parent=1 // pred_region
      _
    $region25: #{tpu_custom_call.1} parent=1 // pred_fallthru
      _
    // Predicated region
    $region26: #{tpu_custom_call.1} parent=1 // pred_check
      _
    $region27: #{tpu_custom_call.1} parent=1 // pred_check_branch
      %28 = sbr.rel (0) target = $region29
    $region28: #{tpu_custom_call.1} parent=1 // pred_region
      _
    $region29: #{tpu_custom_call.1} parent=1 // pred_fallthru
      _
    %v29 = vld [vmem:[%s0] sm:$0xff]
    %v30 = vld [vmem:[%s1] sm:$0xff]
    %v31 = vld [vmem:[%s1 + $0x8] sm:$0xff]
    %v32 = vld [vmem:[%s1 + $0x10] sm:$0xff]
    %v33 = vld [vmem:[%s1 + $0x18] sm:$0xff]
    %v34 = vld [vmem:[%s1 + $0x20] sm:$0xff]
    %v35 = vld [vmem:[%s1 + $0x28] sm:$0xff]
    %v36 = vld [vmem:[%s1 + $0x30] sm:$0xff]
    %v37 = vld [vmem:[%s1 + $0x38] sm:$0xff]
    %v38 = vld [vmem:[%s2] sm:$0xff]
    %v39 = vld [vmem:[%s2 + $0x8] sm:$0xff]
    %v40 = vld [vmem:[%s2 + $0x10] sm:$0xff]
    %v41 = vld [vmem:[%s2 + $0x18] sm:$0xff]
    %v42 = vld [vmem:[%s2 + $0x20] sm:$0xff]
    %v43 = vld [vmem:[%s2 + $0x28] sm:$0xff]
    %v44 = vld [vmem:[%s2 + $0x30] sm:$0xff]
    %v45 = vld [vmem:[%s2 + $0x38] sm:$0xff]
    %47 = vset.pattern.permute.xlu0 0
    %48 = vperm.xlu0 %47, %v38
    %v49 = vpop.permute.xlu0 %48
    %52 = vset.pattern.permute.xlu0 0
    %53 = vperm.xlu0 %52, %v39
    %v54 = vpop.permute.xlu0 %53
    %57 = vset.pattern.permute.xlu0 0
    %58 = vperm.xlu0 %57, %v40
    %v59 = vpop.permute.xlu0 %58
    %62 = vset.pattern.permute.xlu0 0
    %63 = vperm.xlu0 %62, %v41
    %v64 = vpop.permute.xlu0 %63
    %67 = vset.pattern.permute.xlu0 0
    %68 = vperm.xlu0 %67, %v42
    %v69 = vpop.permute.xlu0 %68
    %72 = vset.pattern.permute.xlu0 0
    %73 = vperm.xlu0 %72, %v43
    %v74 = vpop.permute.xlu0 %73
    %77 = vset.pattern.permute.xlu0 0
    %78 = vperm.xlu0 %77, %v44
    %v79 = vpop.permute.xlu0 %78
    %82 = vset.pattern.permute.xlu0 0
    %83 = vperm.xlu0 %82, %v45
    %v84 = vpop.permute.xlu0 %83
    %vm86 = vcmask 130048
    %v88 = vsel %vm86, %v30, 0
    %v91 = vsel %vm86, %v31, 0
    %v94 = vsel %vm86, %v32, 0
    %v97 = vsel %vm86, %v33, 0
    %v100 = vsel %vm86, %v34, 0
    %v103 = vsel %vm86, %v35, 0
    %v106 = vsel %vm86, %v36, 0
    %v109 = vsel %vm86, %v37, 0
    %v112 = vsel %vm86, %v29, 0
    %114 = vmatprep.subr.mxu0 0.0
    %115 = vmatpush1.xpose.msra.mxu0 %v112
    %116 = vmatprep.subr.mxu0 0.0
    %117 = vmatpush1.xpose.msra.mxu0 0.0
    %118 = vmatprep.subr.mxu0 0.0
    %119 = vmatpush1.xpose.msra.mxu0 0.0
    %120 = vmatprep.subr.mxu0 0.0
    %121 = vmatpush1.xpose.msra.mxu0 0.0
    %122 = vmatprep.subr.mxu0 0.0
    %123 = vmatpush1.xpose.msra.mxu0 0.0
    %124 = vmatprep.subr.mxu0 0.0
    %125 = vmatpush1.xpose.msra.mxu0 0.0
    %126 = vmatprep.subr.mxu0 0.0
    %127 = vmatpush1.xpose.msra.mxu0 0.0
    %128 = vmatprep.subr.mxu0 0.0
    %129 = vmatpush1.xpose.msra.mxu0 0.0
    %130 = vmatprep.subr.mxu0 0.0
    %131 = vmatpush1.xpose.msra.mxu0 0.0
    %132 = vmatprep.subr.mxu0 0.0
    %133 = vmatpush1.xpose.msra.mxu0 0.0
    %134 = vmatprep.subr.mxu0 0.0
    %135 = vmatpush1.xpose.msra.mxu0 0.0
    %136 = vmatprep.subr.mxu0 0.0
    %137 = vmatpush1.xpose.msra.mxu0 0.0
    %138 = vmatprep.subr.mxu0 0.0
    %139 = vmatpush1.xpose.msra.mxu0 0.0
    %140 = vmatprep.subr.mxu0 0.0
    %141 = vmatpush1.xpose.msra.mxu0 0.0
    %142 = vmatprep.subr.mxu0 0.0
    %143 = vmatpush1.xpose.msra.mxu0 0.0
    %144 = vmatprep.subr.mxu0 0.0
    %145 = vmatpush1.xpose.msra.mxu0 0.0
    %146 = vmatprep.subr.mxu0 0.0
    %147 = vmatpush1.xpose.msra.mxu0 0.0
    %148 = vmatprep.subr.mxu0 0.0
    %149 = vmatpush1.xpose.msra.mxu0 0.0
    %150 = vmatprep.subr.mxu0 0.0
    %151 = vmatpush1.xpose.msra.mxu0 0.0
    %152 = vmatprep.subr.mxu0 0.0
    %153 = vmatpush1.xpose.msra.mxu0 0.0
    %154 = vmatprep.subr.mxu0 0.0
    %155 = vmatpush1.xpose.msra.mxu0 0.0
    %156 = vmatprep.subr.mxu0 0.0
    %157 = vmatpush1.xpose.msra.mxu0 0.0
    %158 = vmatprep.subr.mxu0 0.0
    %159 = vmatpush1.xpose.msra.mxu0 0.0
    %160 = vmatprep.subr.mxu0 0.0
    %161 = vmatpush1.xpose.msra.mxu0 0.0
    %162 = vmatprep.subr.mxu0 0.0
    %163 = vmatpush1.xpose.msra.mxu0 0.0
    %164 = vmatprep.subr.mxu0 0.0
    %165 = vmatpush1.xpose.msra.mxu0 0.0
    %166 = vmatprep.subr.mxu0 0.0
    %167 = vmatpush1.xpose.msra.mxu0 0.0
    %168 = vmatprep.subr.mxu0 0.0
    %169 = vmatpush1.xpose.msra.mxu0 0.0
    %170 = vmatprep.subr.mxu0 0.0
    %171 = vmatpush1.xpose.msra.mxu0 0.0
    %172 = vmatprep.subr.mxu0 0.0
    %173 = vmatpush1.xpose.msra.mxu0 0.0
    %174 = vmatprep.subr.mxu0 0.0
    %175 = vmatpush1.xpose.msra.mxu0 0.0
    %176 = vmatprep.subr.mxu0 0.0
    %177 = vmatpush1.xpose.msra.mxu0 0.0
    %178 = vmatprep.mubr.f32.mxu0 0.0
    %179 = vmatmul.mubr.f32.gmra.mrb[0].mxu0 %v88
    %v180 = vpop.f32.mrb[0].mxu0
    %v181 = vadd.f32 %v49, %v180
    %v182 = vpop.f32.mrb[0].mxu0
    %183 = vmatprep.mubr.f32.mxu0 0.0
    %184 = vmatmul.mubr.f32.gmra.mrb[0].mxu0 %v91
    %v185 = vpop.f32.mrb[0].mxu0
    %v186 = vadd.f32 %v54, %v185
    %v187 = vpop.f32.mrb[0].mxu0
    %188 = vmatprep.mubr.f32.mxu0 0.0
    %189 = vmatmul.mubr.f32.gmra.mrb[0].mxu0 %v94
    %v190 = vpop.f32.mrb[0].mxu0
    %v191 = vadd.f32 %v59, %v190
    %v192 = vpop.f32.mrb[0].mxu0
    %193 = vmatprep.mubr.f32.mxu0 0.0
    %194 = vmatmul.mubr.f32.gmra.mrb[0].mxu0 %v97
    %v195 = vpop.f32.mrb[0].mxu0
    %v196 = vadd.f32 %v64, %v195
    %v197 = vpop.f32.mrb[0].mxu0
    %198 = vmatprep.mubr.f32.mxu0 0.0
    %199 = vmatmul.mubr.f32.gmra.mrb[0].mxu0 %v100
    %v200 = vpop.f32.mrb[0].mxu0
    %v201 = vadd.f32 %v69, %v200
    %v202 = vpop.f32.mrb[0].mxu0
    %203 = vmatprep.mubr.f32.mxu0 0.0
    %204 = vmatmul.mubr.f32.gmra.mrb[0].mxu0 %v103
    %v205 = vpop.f32.mrb[0].mxu0
    %v206 = vadd.f32 %v74, %v205
    %v207 = vpop.f32.mrb[0].mxu0
    %208 = vmatprep.mubr.f32.mxu0 0.0
    %209 = vmatmul.mubr.f32.gmra.mrb[0].mxu0 %v106
    %v210 = vpop.f32.mrb[0].mxu0
    %v211 = vadd.f32 %v79, %v210
    %v212 = vpop.f32.mrb[0].mxu0
    %213 = vmatprep.mubr.f32.mxu0 0.0
    %214 = vmatmul.mubr.f32.gmra.mrb[0].mxu0 %v109
    %v215 = vpop.f32.mrb[0].mxu0
    %v216 = vadd.f32 %v84, %v215
    %v217 = vpop.f32.mrb[0].mxu0
    %218 = vdwg.mxu0
    %v219 = vmax.f32 %v181, 0.0
    %v220 = vmax.f32 %v186, 0.0
    %v221 = vmax.f32 %v191, 0.0
    %v222 = vmax.f32 %v196, 0.0
    %v223 = vmax.f32 %v201, 0.0
    %v224 = vmax.f32 %v206, 0.0
    %v225 = vmax.f32 %v211, 0.0
    %v226 = vmax.f32 %v216, 0.0
    %v227 = vld [vmem:[%s3] sm:$0xff]
    %v228 = vld [vmem:[%s3 + $0x8] sm:$0xff]
    %v229 = vld [vmem:[%s3 + $0x10] sm:$0xff]
    %v230 = vld [vmem:[%s3 + $0x18] sm:$0xff]
    %v231 = vld [vmem:[%s4] sm:$0xff]
    %v232 = vld [vmem:[%s4 + $0x8] sm:$0xff]
    %v233 = vld [vmem:[%s4 + $0x10] sm:$0xff]
    %v234 = vld [vmem:[%s4 + $0x18] sm:$0xff]
    %236 = vset.pattern.permute.xlu0 0
    %237 = vperm.xlu0 %236, %v231
    %v238 = vpop.permute.xlu0 %237
    %241 = vset.pattern.permute.xlu0 0
    %242 = vperm.xlu0 %241, %v232
    %v243 = vpop.permute.xlu0 %242
    %246 = vset.pattern.permute.xlu0 0
    %247 = vperm.xlu0 %246, %v233
    %v248 = vpop.permute.xlu0 %247
    %251 = vset.pattern.permute.xlu0 0
    %252 = vperm.xlu0 %251, %v234
    %v253 = vpop.permute.xlu0 %252
    %vm255 = vcmask 523264
    %v257 = vsel %vm255, %v227, 0
    %v260 = vsel %vm255, %v228, 0
    %v263 = vsel %vm255, %v229, 0
    %v266 = vsel %vm255, %v230, 0
    %268 = vmatprep.subr.mxu0 0.0
    %269 = vmatpush1.msra.mxu0 %v219
    %270 = vmatprep.subr.mxu0 0.0
    %271 = vmatpush1.msra.mxu0 %v220
    %272 = vmatprep.subr.mxu0 0.0
    %273 = vmatpush1.msra.mxu0 %v221
    %274 = vmatprep.subr.mxu0 0.0
    %275 = vmatpush1.msra.mxu0 %v222
    %276 = vmatprep.subr.mxu0 0.0
    %277 = vmatpush1.msra.mxu0 %v223
    %278 = vmatprep.subr.mxu0 0.0
    %279 = vmatpush1.msra.mxu0 %v224
    %280 = vmatprep.subr.mxu0 0.0
    %281 = vmatpush1.msra.mxu0 %v225
    %282 = vmatprep.subr.mxu0 0.0
    %283 = vmatpush1.msra.mxu0 %v226
    %284 = vmatprep.subr.mxu0 0.0
    %285 = vmatpush1.msra.mxu0 0.0
    %286 = vmatprep.subr.mxu0 0.0
    %287 = vmatpush1.msra.mxu0 0.0
    %288 = vmatprep.subr.mxu0 0.0
    %289 = vmatpush1.msra.mxu0 0.0
    %290 = vmatprep.subr.mxu0 0.0
    %291 = vmatpush1.msra.mxu0 0.0
    %292 = vmatprep.subr.mxu0 0.0
    %293 = vmatpush1.msra.mxu0 0.0
    %294 = vmatprep.subr.mxu0 0.0
    %295 = vmatpush1.msra.mxu0 0.0
    %296 = vmatprep.subr.mxu0 0.0
    %297 = vmatpush1.msra.mxu0 0.0
    %298 = vmatprep.subr.mxu0 0.0
    %299 = vmatpush1.msra.mxu0 0.0
    %300 = vmatprep.subr.mxu0 0.0
    %301 = vmatpush1.msra.mxu0 0.0
    %302 = vmatprep.subr.mxu0 0.0
    %303 = vmatpush1.msra.mxu0 0.0
    %304 = vmatprep.subr.mxu0 0.0
    %305 = vmatpush1.msra.mxu0 0.0
    %306 = vmatprep.subr.mxu0 0.0
    %307 = vmatpush1.msra.mxu0 0.0
    %308 = vmatprep.subr.mxu0 0.0
    %309 = vmatpush1.msra.mxu0 0.0
    %310 = vmatprep.subr.mxu0 0.0
    %311 = vmatpush1.msra.mxu0 0.0
    %312 = vmatprep.subr.mxu0 0.0
    %313 = vmatpush1.msra.mxu0 0.0
    %314 = vmatprep.subr.mxu0 0.0
    %315 = vmatpush1.msra.mxu0 0.0
    %316 = vmatprep.subr.mxu0 0.0
    %317 = vmatpush1.msra.mxu0 0.0
    %318 = vmatprep.subr.mxu0 0.0
    %319 = vmatpush1.msra.mxu0 0.0
    %320 = vmatprep.subr.mxu0 0.0
    %321 = vmatpush1.msra.mxu0 0.0
    %322 = vmatprep.subr.mxu0 0.0
    %323 = vmatpush1.msra.mxu0 0.0
    %324 = vmatprep.subr.mxu0 0.0
    %325 = vmatpush1.msra.mxu0 0.0
    %326 = vmatprep.subr.mxu0 0.0
    %327 = vmatpush1.msra.mxu0 0.0
    %328 = vmatprep.subr.mxu0 0.0
    %329 = vmatpush1.msra.mxu0 0.0
    %330 = vmatprep.subr.mxu0 0.0
    %331 = vmatpush1.msra.mxu0 0.0
    %332 = vmatprep.mubr.f32.mxu0 0.0
    %333 = vmatmul.mubr.f32.gmra.mrb[0].mxu0 %v257
    %v334 = vpop.f32.mrb[0].mxu0
    %v335 = vadd.f32 %v238, %v334
    %v336 = vpop.f32.mrb[0].mxu0
    %337 = vmatprep.mubr.f32.mxu0 0.0
    %338 = vmatmul.mubr.f32.gmra.mrb[0].mxu0 %v260
    %v339 = vpop.f32.mrb[0].mxu0
    %v340 = vadd.f32 %v243, %v339
    %v341 = vpop.f32.mrb[0].mxu0
    %342 = vmatprep.mubr.f32.mxu0 0.0
    %343 = vmatmul.mubr.f32.gmra.mrb[0].mxu0 %v263
    %v344 = vpop.f32.mrb[0].mxu0
    %v345 = vadd.f32 %v248, %v344
    %v346 = vpop.f32.mrb[0].mxu0
    %347 = vmatprep.mubr.f32.mxu0 0.0
    %348 = vmatmul.mubr.f32.gmra.mrb[0].mxu0 %v266
    %v349 = vpop.f32.mrb[0].mxu0
    %v350 = vadd.f32 %v253, %v349
    %v351 = vpop.f32.mrb[0].mxu0
    %352 = vdwg.mxu0
    %v353 = vmax.f32 %v335, 0.0
    %v354 = vmax.f32 %v340, 0.0
    %v355 = vmax.f32 %v345, 0.0
    %v356 = vmax.f32 %v350, 0.0
    %v357 = vld [vmem:[%s5] sm:$0xff]
    %vm358 = vcmask 261120
    %v360 = vsel %vm358, %v357, 0
    %362 = vmatprep.subr.mxu0 0.0
    %363 = vmatpush1.msra.mxu0 %v353
    %364 = vmatprep.subr.mxu0 0.0
    %365 = vmatpush1.msra.mxu0 %v354
    %366 = vmatprep.subr.mxu0 0.0
    %367 = vmatpush1.msra.mxu0 %v355
    %368 = vmatprep.subr.mxu0 0.0
    %369 = vmatpush1.msra.mxu0 %v356
    %370 = vmatprep.subr.mxu0 0.0
    %371 = vmatpush1.msra.mxu0 0.0
    %372 = vmatprep.subr.mxu0 0.0
    %373 = vmatpush1.msra.mxu0 0.0
    %374 = vmatprep.subr.mxu0 0.0
    %375 = vmatpush1.msra.mxu0 0.0
    %376 = vmatprep.subr.mxu0 0.0
    %377 = vmatpush1.msra.mxu0 0.0
    %378 = vmatprep.subr.mxu0 0.0
    %379 = vmatpush1.msra.mxu0 0.0
    %380 = vmatprep.subr.mxu0 0.0
    %381 = vmatpush1.msra.mxu0 0.0
    %382 = vmatprep.subr.mxu0 0.0
    %383 = vmatpush1.msra.mxu0 0.0
    %384 = vmatprep.subr.mxu0 0.0
    %385 = vmatpush1.msra.mxu0 0.0
    %386 = vmatprep.subr.mxu0 0.0
    %387 = vmatpush1.msra.mxu0 0.0
    %388 = vmatprep.subr.mxu0 0.0
    %389 = vmatpush1.msra.mxu0 0.0
    %390 = vmatprep.subr.mxu0 0.0
    %391 = vmatpush1.msra.mxu0 0.0
    %392 = vmatprep.subr.mxu0 0.0
    %393 = vmatpush1.msra.mxu0 0.0
    %394 = vmatprep.subr.mxu0 0.0
    %395 = vmatpush1.msra.mxu0 0.0
    %396 = vmatprep.subr.mxu0 0.0
    %397 = vmatpush1.msra.mxu0 0.0
    %398 = vmatprep.subr.mxu0 0.0
    %399 = vmatpush1.msra.mxu0 0.0
    %400 = vmatprep.subr.mxu0 0.0
    %401 = vmatpush1.msra.mxu0 0.0
    %402 = vmatprep.subr.mxu0 0.0
    %403 = vmatpush1.msra.mxu0 0.0
    %404 = vmatprep.subr.mxu0 0.0
    %405 = vmatpush1.msra.mxu0 0.0
    %406 = vmatprep.subr.mxu0 0.0
    %407 = vmatpush1.msra.mxu0 0.0
    %408 = vmatprep.subr.mxu0 0.0
    %409 = vmatpush1.msra.mxu0 0.0
    %410 = vmatprep.subr.mxu0 0.0
    %411 = vmatpush1.msra.mxu0 0.0
    %412 = vmatprep.subr.mxu0 0.0
    %413 = vmatpush1.msra.mxu0 0.0
    %414 = vmatprep.subr.mxu0 0.0
    %415 = vmatpush1.msra.mxu0 0.0
    %416 = vmatprep.subr.mxu0 0.0
    %417 = vmatpush1.msra.mxu0 0.0
    %418 = vmatprep.subr.mxu0 0.0
    %419 = vmatpush1.msra.mxu0 0.0
    %420 = vmatprep.subr.mxu0 0.0
    %421 = vmatpush1.msra.mxu0 0.0
    %422 = vmatprep.subr.mxu0 0.0
    %423 = vmatpush1.msra.mxu0 0.0
    %424 = vmatprep.subr.mxu0 0.0
    %425 = vmatpush1.msra.mxu0 0.0
    %426 = vmatprep.mubr.f32.mxu0 0.0
    %427 = vmatmul.mubr.f32.gmra.mrb[0].mxu0 %v360
    %v428 = vpop.f32.mrb[0].mxu0
    %v429 = vadd.f32 0.0, %v428
    %v430 = vpop.f32.mrb[0].mxu0
    %431 = vdwg.mxu0
    %v432 = vld [vmem:[#allocation2] sm:$0x1]
    %434 = vset.pattern.permute.xlu0 0
    %435 = vperm.xlu0 %434, %v432
    %v436 = vpop.permute.xlu0 %435
    %v438 = vlaneseq
    %v439 = vshrl.u32 %v438, 7
    %v440 = vsub.s32 0, %v439
    %v441 = vrot.slane %v436, %v440
    %v442 = vadd.f32 %v429, %v441
    %vm443 = vcmask 57344
    %444 = vst.msk [vmem:[#allocation3] sm:$0x1] %vm443, %v442
    // Predicated region
    $region30: #{tpu_custom_call.1} parent=1 // pred_check
      _
    $region31: #{tpu_custom_call.1} parent=1 // pred_check_branch
      %446 = sbr.rel (0) target = $region33
    $region32: #{tpu_custom_call.1} parent=1 // pred_region
      %s448 = ssub.s32 16, 16
      %449 = vsyncadd [#allocation4], %s448
      %s451 = sshll.u32 [#allocation3], 4
      %s452 = int_to_ptr.vmem [resolvable:$true] %s451
      %454 = dma.vmem_to_hbm [thread:$0]  %s452, 16, %s7, [#allocation4]
    $region33: #{tpu_custom_call.1} parent=1 // pred_fallthru
      _
    // Predicated region
    $region34: #{tpu_custom_call.1} parent=1 // pred_check
      _
    $region35: #{tpu_custom_call.1} parent=1 // pred_check_branch
      %456 = sbr.rel (0) target = $region37
    $region36: #{tpu_custom_call.1} parent=1 // pred_region
      %457 = dma.done [#allocation4], 16
    $region37: #{tpu_custom_call.1} parent=1 // pred_fallthru
      _
    %458 = vsyncpa [#allocation4], 1

</llo_original>
